<compile_context>
chip_gen: v5e
topology: v5e:2x2
jax: 0.10.0
libtpu: 0.0.40
codegen_flags: <defaults>
</compile_context>

<pallas_src>
import functools
import math

import jax
import jax.numpy as jnp
from jax.experimental import pallas as pl
from jax.experimental.pallas import tpu as pltpu


# -----------------------------------------------------------------------------
# erf via Abramowitz & Stegun 7.1.26 (max abs error 1.5e-7) — exact GELU needs
# erf and Mosaic has no guaranteed erf primitive.
# -----------------------------------------------------------------------------
def _erf_f32(x):
    a1, a2, a3, a4, a5 = (0.254829592, -0.284496736, 1.421413741,
                          -1.453152027, 1.061405429)
    p = 0.3275911
    ax = jnp.abs(x)
    t = 1.0 / (1.0 + p * ax)
    poly = ((((a5 * t + a4) * t + a3) * t + a2) * t + a1) * t
    y = 1.0 - poly * jnp.exp(-ax * ax)
    return jnp.where(x >= 0.0, y, -y)


# -----------------------------------------------------------------------------
# Elementwise activation kernel. `name` / `epsilon` are static (baked at trace
# time), matching the PyTorch module where the activation is fixed in __init__.
# -----------------------------------------------------------------------------
def _activation_kernel(x_ref, o_ref, *, name, epsilon):
    if name == "relu":
        # max() is exact in the native dtype -> skip the f32 upcast entirely.
        o_ref[...] = jnp.maximum(x_ref[...], jnp.zeros((), x_ref.dtype))
        return

    x = x_ref[...].astype(jnp.float32)  # transcendental math in f32 (v5e-safe)

    if name == "softplus":
        # Stable softplus: max(x,0) + log1p(exp(-|x|))
        y = jnp.maximum(x, 0.0) + jnp.log1p(jnp.exp(-jnp.abs(x)))
    elif name == "gelu":
        # Exact (erf-based) GELU, matching F.gelu default.
        y = 0.5 * x * (1.0 + _erf_f32(x * (1.0 / math.sqrt(2.0))))
    elif name == "sigmoid":
        y = 1.0 / (1.0 + jnp.exp(-x))
    elif name == "sigmoid_x":
        s = 1.0 / (1.0 + jnp.exp(-x))
        y = jnp.clip(s * (1.0 + 2.0 * epsilon) - epsilon, 0.0, 1.0)
    else:  # identity (normally handled in the wrapper)
        y = x

    o_ref[...] = y.astype(o_ref.dtype)


# -----------------------------------------------------------------------------
# Layout helpers.
# -----------------------------------------------------------------------------
def _choose_layout(total):
    """Return (cols, pad): cols % 128 == 0 and (total + pad) % cols == 0."""
    best = None
    for cols in (2048, 1024, 512, 384, 256, 128):
        if total % cols == 0:
            if total // cols >= 8:          # prefer a layout with >= 8 rows
                return cols, 0
            if best is None:
                best = cols
    if best is not None:
        return best, 0
    # No 128-multiple divisor: pad the flat array up to a multiple of 128 so
    # every store is a full, unmasked lane-dense vst.
    cols = 128
    pad = (-total) % cols
    return cols, pad


def _choose_block_rows(rows, cols, itemsize):
    """Byte-targeted block rows (multiple of 8), keeping >= ~8 grid steps."""
    if rows <= 8:
        return rows                          # full-array block (legal layout)
    target_bytes = 2 << 20                   # ~2 MiB/buffer: safe v5e/v6e/v7x
    bm_bytes = max(8, (target_bytes // (cols * itemsize)) // 8 * 8)
    min_steps = 8                            # pipelining + v7x dual-TC sharding
    per_step = max(8, (((rows + min_steps - 1) // min_steps) + 7) // 8 * 8)
    return max(8, min(bm_bytes, per_step))


_TRANSCENDENTALS_PER_ELEM = {
    "relu": 0, "softplus": 2, "gelu": 1, "sigmoid": 1, "sigmoid_x": 1,
}


# -----------------------------------------------------------------------------
# Wrapper: flatten to a lane-dense 2-D layout, tile rows by bytes, parallel
# grid axis, auto-pipelined by BlockSpec.
# -----------------------------------------------------------------------------
def activation_pallas(x, name, epsilon=1e-3):
    if name is None:
        return x  # identity: returning x is exact and free
    if x.size == 0:
        return x

    orig_shape = x.shape
    total = int(x.size)
    cols, pad = _choose_layout(total)

    if pad:
        flat = jnp.pad(x.reshape(-1), (0, pad))      # tail sliced off below
    else:
        flat = x.reshape(-1)                          # metadata-only reshape

    rows = (total + pad) // cols
    x2 = flat.reshape(rows, cols)

    bm = _choose_block_rows(rows, cols, x2.dtype.itemsize)
    grid = (pl.cdiv(rows, bm),)

    kernel = functools.partial(_activation_kernel, name=name, epsilon=epsilon)
    cost = pl.CostEstimate(
        flops=(1 if name == "relu" else 10) * total,
        transcendentals=_TRANSCENDENTALS_PER_ELEM.get(name, 0) * total,
        bytes_accessed=2 * total * x2.dtype.itemsize,
    )

    out = pl.pallas_call(
        kernel,
        out_shape=jax.ShapeDtypeStruct((rows, cols), x.dtype),
        grid=grid,
        in_specs=[pl.BlockSpec((bm, cols), lambda i: (i, 0))],
        out_specs=pl.BlockSpec((bm, cols), lambda i: (i, 0)),
        compiler_params=pltpu.CompilerParams(
            dimension_semantics=("parallel",)),
        cost_estimate=cost,
    )(x2)

    out_flat = out.reshape(-1)
    if pad:
        out_flat = out_flat[:total]
    return out_flat.reshape(orig_shape)


# -----------------------------------------------------------------------------
# Module-style wrapper mirroring Activation.__init__ / forward.
# -----------------------------------------------------------------------------
class ActivationPallas:
    _VALID = ("relu", "softplus", "gelu", "sigmoid", "sigmoid_x", None)

    def __init__(self, name, **kwargs):
        if name not in self._VALID:
            raise RuntimeError(f"Unknown activation name: {name}")
        self.name = name
        self.epsilon = kwargs.get("epsilon", 0.001)

    def __call__(self, x):
        return activation_pallas(x, self.name, self.epsilon)


if __name__ == "__main__":
    key = jax.random.PRNGKey(0)
    x = 3.0 * jax.random.normal(key, (2, 4, 16, 16), jnp.float32)

    eps = 0.001
    references = {
        "relu": jax.nn.relu,
        "softplus": jax.nn.softplus,
        "gelu": lambda v: jax.nn.gelu(v, approximate=False),
        "sigmoid": jax.nn.sigmoid,
        "sigmoid_x": lambda v: jnp.clip(
            jax.nn.sigmoid(v) * (1.0 + 2.0 * eps) - eps, 0.0, 1.0),
        None: lambda v: v,
    }

    for name, ref_fn in references.items():
        act = ActivationPallas(name, epsilon=eps)
        y = jax.block_until_ready(act(x))
        r = ref_fn(x)
        assert y.shape == x.shape and y.dtype == x.dtype, name
        assert bool(jnp.all(jnp.isfinite(y))), name
        assert bool(jnp.allclose(y, r, atol=2e-5, rtol=1e-5)), name

    # Exercise the padding fallback (element count not a multiple of 128).
    x_odd = 2.0 * jax.random.normal(jax.random.PRNGKey(1), (3, 7, 11),
                                    jnp.float32)
    y_odd = jax.block_until_ready(activation_pallas(x_odd, "gelu"))
    r_odd = jax.nn.gelu(x_odd, approximate=False)
    assert y_odd.shape == x_odd.shape
    assert bool(jnp.allclose(y_odd, r_odd, atol=2e-5, rtol=1e-5))

    # bf16 relu path (no f32 upcast, exact).
    x_bf = x.astype(jnp.bfloat16)
    y_bf = jax.block_until_ready(activation_pallas(x_bf, "relu"))
    assert y_bf.dtype == jnp.bfloat16
    assert bool(jnp.all(y_bf == jnp.maximum(x_bf, 0)))

    print("KERNEL_OK")
</pallas_src>

<mosaic_0001>
module attributes {stable_mosaic.version = 11 : i64} {
  func.func @_activation_kernel(%arg0: i32, %arg1: memref<8x256xf32, #tpu.memory_space<vmem>>, %arg2: memref<8x256xf32, #tpu.memory_space<vmem>>) attributes {dimension_semantics = [#tpu.dimension_semantics<parallel>], iteration_bounds = array<i64: 1>, scalar_prefetch = 0 : i64, scratch_operands = 0 : i64, tpu.core_type = #tpu.core_type<tc>, window_params = [{transform_indices = @transform_0, window_bounds = array<i64: 8, 256>}, {transform_indices = @transform_1, window_bounds = array<i64: 8, 256>}]} {
    %c0 = arith.constant 0 : index
    %c0_0 = arith.constant 0 : index
    %0 = vector.load %arg1[%c0, %c0_0] : memref<8x256xf32, #tpu.memory_space<vmem>>, vector<8x256xf32>
    %cst = arith.constant 0.000000e+00 : f32
    %1 = vector.broadcast %cst : f32 to vector<8x256xf32>
    %2 = arith.maximumf %0, %1 : vector<8x256xf32>
    %c0_1 = arith.constant 0 : index
    %c0_2 = arith.constant 0 : index
    %3 = vector.load %arg2[%c0_1, %c0_2] : memref<8x256xf32, #tpu.memory_space<vmem>>, vector<8x256xf32>
    tpu.vector_store %arg2[%c0_1, %c0_2], %2 {strides = array<i32>} : memref<8x256xf32, #tpu.memory_space<vmem>>, vector<8x256xf32>,
    return
  }
  func.func @transform_0(%arg0: i32) -> (i32, i32) {
    %c0_i32 = arith.constant 0 : i32
    %c0_i32_0 = arith.constant 0 : i32
    return %arg0, %c0_i32 : i32, i32
  }
  func.func @transform_1(%arg0: i32) -> (i32, i32) {
    %c0_i32 = arith.constant 0 : i32
    %c0_i32_0 = arith.constant 0 : i32
    return %arg0, %c0_i32 : i32, i32
  }
}

</mosaic_0001>

<llo_original>
// kernel: tpu_custom_call.1
$region0: #{tpu_custom_call.1}
  #allocation0 [shape = 'u32[]', space=smem, size = 0x4, offset = 0x4, fixed_abs, tag = 'smem constant byte address 0x4 - core index']
  #allocation1 [shape = 'u32[72,128]{1,0:T(1,128)}', space=vmem, size = 0x9000, scoped, tag = 'internal scratch']
  %s0 = inlined_call_operand.hbm [shape: f32[8,256], index: 0, kind: input, shape index: {}]
  %s1 = inlined_call_operand.hbm [shape: f32[8,256], index: 1, kind: output, shape index: {}]
  %s2 = sld [smem:[#allocation0]]
  $region18: #{tpu_custom_call.1} parent=0
    _
  %s4 = ssub.s32 1, %s2
  %s5 = scalar_select 0, %s4, %s2
  $region1: #{tpu_custom_call.1} parent=0
    #allocation2 [shape = 'u8[8192]{0}', space=vmem, size = 0x2000, scoped, tag = 'input window, operand 0, single buffered']
    #allocation3 [shape = 's32[1]{0}', space=sflag, size = 0x4, scoped, tag = 'scoped memory for tpu_custom_call.1']
    #allocation4 [shape = 's32[1]{0}', space=sflag, size = 0x4, scoped, tag = 'scoped memory for tpu_custom_call.1']
    #allocation5 [shape = 'u8[8192]{0}', space=vmem, size = 0x2000, scoped, tag = 'output window, operand 0, single buffered']
    %6 = vsyncpa [#allocation3], 0
    %7 = vsyncpa [#allocation4], 0
    // Predicated region
    $region2: #{tpu_custom_call.1} parent=1 // pred_check
      _
    $region3: #{tpu_custom_call.1} parent=1 // pred_check_branch
      %9 = sbr.rel (0) target = $region5
    $region4: #{tpu_custom_call.1} parent=1 // pred_region
      %11 = vsyncadd [#allocation3], 0
      %s13 = sshll.u32 %s0, 4
      %s14 = int_to_ptr.hbm [resolvable:$true] %s13
      %s15 = sshll.u32 [#allocation2], 4
      %s16 = int_to_ptr.vmem [resolvable:$true] %s15
      %18 = dma.hbm_to_vmem [thread:$0]  %s14, 256, %s16, [#allocation3]
    $region5: #{tpu_custom_call.1} parent=1 // pred_fallthru
      _
    // Predicated region
    $region6: #{tpu_custom_call.1} parent=1 // pred_check
      _
    $region7: #{tpu_custom_call.1} parent=1 // pred_check_branch
      %20 = sbr.rel (0) target = $region9
    $region8: #{tpu_custom_call.1} parent=1 // pred_region
      %22 = dma.done [#allocation3], 256
    $region9: #{tpu_custom_call.1} parent=1 // pred_fallthru
      _
    %v23 = vld [vmem:[#allocation2] sm:$0xff]
    %v24 = vld [vmem:[#allocation2 + $0x8] sm:$0xff]
    %v25 = vmax.f32 %v23, 0.0
    %v26 = vmax.f32 %v24, 0.0
    %27 = vst [vmem:[#allocation5] sm:$0xff] %v25
    %28 = vst [vmem:[#allocation5 + $0x8] sm:$0xff] %v26
    // Predicated region
    $region10: #{tpu_custom_call.1} parent=1 // pred_check
      _
    $region11: #{tpu_custom_call.1} parent=1 // pred_check_branch
      %30 = sbr.rel (0) target = $region13
    $region12: #{tpu_custom_call.1} parent=1 // pred_region
      %32 = vsyncadd [#allocation4], 0
      %s34 = sshll.u32 [#allocation5], 4
      %s35 = int_to_ptr.vmem [resolvable:$true] %s34
      %s36 = sshll.u32 %s1, 4
      %s37 = int_to_ptr.hbm [resolvable:$true] %s36
      %39 = dma.vmem_to_hbm [thread:$0]  %s35, 256, %s37, [#allocation4]
    $region13: #{tpu_custom_call.1} parent=1 // pred_fallthru
      _
    // Predicated region
    $region14: #{tpu_custom_call.1} parent=1 // pred_check
      _
    $region15: #{tpu_custom_call.1} parent=1 // pred_check_branch
      %41 = sbr.rel (0) target = $region17
    $region16: #{tpu_custom_call.1} parent=1 // pred_region
      %43 = dma.done [#allocation4], 256
    $region17: #{tpu_custom_call.1} parent=1 // pred_fallthru
      _
    %44 = vsyncpa [#allocation3], 1
    %45 = vsyncpa [#allocation4], 1

</llo_original>
